<compile_context>
chip_gen: v5e
topology: v5e:2x2
jax: 0.10.0
libtpu: 0.0.40
codegen_flags: <defaults>
</compile_context>

<pallas_src>
import functools
import math

import jax
import jax.numpy as jnp
from jax import lax
from jax.experimental import pallas as pl
from jax.experimental.pallas import tpu as pltpu


def _round_up(x: int, m: int) -> int:
    return ((x + m - 1) // m) * m


def _score_kernel(s_ref, w_ref, o_ref):
    # s_ref: [B, H]   resident session_represent tile (same block every step)
    # w_ref: [TN, H]  one row-major tile of the embedding table
    # o_ref: [B, TN]  scores for those TN items
    # Contract on the last dim of both operands (no transpose materialized).
    o_ref[...] = lax.dot_general(
        s_ref[...],
        w_ref[...],
        dimension_numbers=(((1,), (1,)), ((), ())),
        preferred_element_type=jnp.float32,
    ).astype(o_ref.dtype)


@functools.partial(jax.jit, static_argnames=("tn",))
def mbgrl_forward(session_represent: jax.Array, embedding_weight: jax.Array,
                  *, tn: int = 4096) -> jax.Array:
    """score = session_represent @ embedding_weight[1:].T  (Pallas matmul).

    embedding_weight is the FULL [n_node + 1, H] table (row 0 = padding row);
    it is streamed row-major with no slice/transpose copies.
    """
    B, H = session_represent.shape
    n_rows, H_w = embedding_weight.shape
    assert H == H_w, "hidden-size mismatch"
    n_node = n_rows - 1

    out_dtype = jnp.result_type(session_represent.dtype, embedding_weight.dtype)

    # Lane tile over the item axis: multiple of 128 (lane-dense output stores),
    # clamped so tiny vocabularies don't allocate huge buffers.
    tn_eff = _round_up(min(tn, _round_up(n_rows, 128)), 128)
    grid_n = pl.cdiv(n_rows, tn_eff)  # ragged tail handled by Pallas masking
    # NOTE(v7x): for best 2-TensorCore balance pick tn so grid_n is even; the
    # "parallel" semantics below already lets Mosaic shard the grid per core.

    itemsize_w = jnp.dtype(embedding_weight.dtype).itemsize
    itemsize_s = jnp.dtype(session_represent.dtype).itemsize
    itemsize_o = jnp.dtype(out_dtype).itemsize
    cost = pl.CostEstimate(
        flops=2 * B * H * n_rows,
        transcendentals=0,
        bytes_accessed=(n_rows * H * itemsize_w
                        + B * H * itemsize_s
                        + B * n_rows * itemsize_o),
    )

    scores_full = pl.pallas_call(
        _score_kernel,
        out_shape=jax.ShapeDtypeStruct((B, n_rows), out_dtype),
        grid_spec=pltpu.PrefetchScalarGridSpec(
            num_scalar_prefetch=0,
            grid=(grid_n,),
            in_specs=[
                # session_represent stays resident in VMEM across all N tiles
                pl.BlockSpec((B, H), lambda j: (0, 0)),
                # one row-major [tn_eff, H] slab of the embedding table
                pl.BlockSpec((tn_eff, H), lambda j: (j, 0)),
            ],
            out_specs=pl.BlockSpec((B, tn_eff), lambda j: (0, j)),
        ),
        compiler_params=pltpu.CompilerParams(
            dimension_semantics=("parallel",),
        ),
        cost_estimate=cost,
    )(session_represent, embedding_weight)

    # Drop the padding row's score (column 0): [B, n_node+1] -> [B, n_node].
    return scores_full[:, 1:]


if __name__ == "__main__":
    # Small shapes consistent with the module.
    hidden_size = 32
    n_node = 256          # embedding table has n_node + 1 rows
    batch = 8

    key = jax.random.PRNGKey(0)
    k_emb, k_sess = jax.random.split(key)

    # reset_parameters(): uniform(-stdv, stdv), stdv = 1/sqrt(hidden_size)
    stdv = 1.0 / math.sqrt(hidden_size)
    embedding_weight = jax.random.uniform(
        k_emb, (n_node + 1, hidden_size), jnp.float32, minval=-stdv, maxval=stdv
    )
    # session_represent is the output of SoftAttention upstream; here a
    # deterministic synthetic input of the right shape/dtype.
    session_represent = jax.random.uniform(
        k_sess, (batch, hidden_size), jnp.float32, minval=-stdv, maxval=stdv
    )

    score = mbgrl_forward(session_represent, embedding_weight)
    score = jax.block_until_ready(score)

    # Reference check (plain JAX) against the torch semantics.
    ref = session_represent @ embedding_weight[1:].T
    assert score.shape == (batch, n_node)
    assert jnp.allclose(score, ref, atol=1e-5, rtol=1e-5)

    print("KERNEL_OK")
</pallas_src>

<mosaic_0001>
module attributes {stable_mosaic.version = 11 : i64} {
  func.func @_score_kernel(%arg0: i32, %arg1: memref<8x32xf32, #tpu.memory_space<vmem>>, %arg2: memref<384x32xf32, #tpu.memory_space<vmem>>, %arg3: memref<8x384xf32, #tpu.memory_space<vmem>>) attributes {dimension_semantics = [#tpu.dimension_semantics<parallel>], iteration_bounds = array<i64: 1>, scalar_prefetch = 0 : i64, scratch_operands = 0 : i64, tpu.core_type = #tpu.core_type<tc>, window_params = [{pipeline_mode = #tpu.pipeline_mode<synchronous>, transform_indices = @transform_0, window_bounds = array<i64: 8, 32>}, {transform_indices = @transform_1, window_bounds = array<i64: 384, 32>}, {transform_indices = @transform_2, window_bounds = array<i64: 8, 384>}]} {
    %c0 = arith.constant 0 : index
    %c0_0 = arith.constant 0 : index
    %0 = vector.load %arg1[%c0, %c0_0] : memref<8x32xf32, #tpu.memory_space<vmem>>, vector<8x32xf32>
    %c0_1 = arith.constant 0 : index
    %c0_2 = arith.constant 0 : index
    %1 = vector.load %arg2[%c0_1, %c0_2] : memref<384x32xf32, #tpu.memory_space<vmem>>, vector<384x32xf32>
    %cst = arith.constant dense<0.000000e+00> : vector<8x384xf32>
    %2 = tpu.matmul %0, %1, %cst {dimension_numbers = #tpu.dot_dimension_numbers<[1], [1], [0], [0], [0, 0, 1, 0], [], []>} : vector<8x32xf32>, vector<384x32xf32>, vector<8x384xf32> -> vector<8x384xf32>
    %c0_3 = arith.constant 0 : index
    %c0_4 = arith.constant 0 : index
    %3 = vector.load %arg3[%c0_3, %c0_4] : memref<8x384xf32, #tpu.memory_space<vmem>>, vector<8x384xf32>
    tpu.vector_store %arg3[%c0_3, %c0_4], %2 {strides = array<i32>} : memref<8x384xf32, #tpu.memory_space<vmem>>, vector<8x384xf32>,
    return
  }
  func.func @transform_0(%arg0: i32) -> (i32, i32) {
    %c0_i32 = arith.constant 0 : i32
    %c0_i32_0 = arith.constant 0 : i32
    %c0_i32_1 = arith.constant 0 : i32
    return %c0_i32, %c0_i32_0 : i32, i32
  }
  func.func @transform_1(%arg0: i32) -> (i32, i32) {
    %c0_i32 = arith.constant 0 : i32
    %c0_i32_0 = arith.constant 0 : i32
    return %arg0, %c0_i32 : i32, i32
  }
  func.func @transform_2(%arg0: i32) -> (i32, i32) {
    %c0_i32 = arith.constant 0 : i32
    %c0_i32_0 = arith.constant 0 : i32
    return %c0_i32, %arg0 : i32, i32
  }
}

</mosaic_0001>

<llo_original>
// kernel: mbgrl_forward.1
$region0: #{mbgrl_forward.1}
  #allocation0 [shape = 'u32[]', space=smem, size = 0x4, offset = 0x4, fixed_abs, tag = 'smem constant byte address 0x4 - core index']
  #allocation1 [shape = 'u32[72,128]{1,0:T(1,128)}', space=vmem, size = 0x9000, scoped, tag = 'internal scratch']
  %s0 = inlined_call_operand.vmem [shape: f32[8,32], index: 0, kind: input, shape index: {}]
  %s1 = inlined_call_operand.vmem [shape: f32[257,32], index: 1, kind: input, shape index: {}]
  %s2 = inlined_call_operand.vmem [shape: f32[8,257], index: 2, kind: output, shape index: {}]
  %s3 = sld [smem:[#allocation0]]
  $region18: #{mbgrl_forward.1} parent=0
    _
  %s5 = ssub.s32 1, %s3
  %s6 = scalar_select 0, %s5, %s3
  // Predicated region
  $region2: #{mbgrl_forward.1} parent=0 // pred_check
    _
  $region3: #{mbgrl_forward.1} parent=0 // pred_check_branch
    %8 = sbr.rel (0) target = $region5
  $region4: #{mbgrl_forward.1} parent=0 // pred_region
    _
  $region5: #{mbgrl_forward.1} parent=0 // pred_fallthru
    _
  // Predicated region
  $region6: #{mbgrl_forward.1} parent=0 // pred_check
    _
  $region7: #{mbgrl_forward.1} parent=0 // pred_check_branch
    %10 = sbr.rel (0) target = $region9
  $region8: #{mbgrl_forward.1} parent=0 // pred_region
    _
  $region9: #{mbgrl_forward.1} parent=0 // pred_fallthru
    _
  %v11 = vld [vmem:[%s0] sm:$0xff]
  %v12 = vld [vmem:[%s1] sm:$0xff]
  %v13 = vld [vmem:[%s1 + $0x8] sm:$0xff]
  %v14 = vld [vmem:[%s1 + $0x10] sm:$0xff]
  %v15 = vld [vmem:[%s1 + $0x18] sm:$0xff]
  %v16 = vld [vmem:[%s1 + $0x20] sm:$0xff]
  %v17 = vld [vmem:[%s1 + $0x28] sm:$0xff]
  %v18 = vld [vmem:[%s1 + $0x30] sm:$0xff]
  %v19 = vld [vmem:[%s1 + $0x38] sm:$0xff]
  %v20 = vld [vmem:[%s1 + $0x40] sm:$0xff]
  %v21 = vld [vmem:[%s1 + $0x48] sm:$0xff]
  %v22 = vld [vmem:[%s1 + $0x50] sm:$0xff]
  %v23 = vld [vmem:[%s1 + $0x58] sm:$0xff]
  %v24 = vld [vmem:[%s1 + $0x60] sm:$0xff]
  %v25 = vld [vmem:[%s1 + $0x68] sm:$0xff]
  %v26 = vld [vmem:[%s1 + $0x70] sm:$0xff]
  %v27 = vld [vmem:[%s1 + $0x78] sm:$0xff]
  %v28 = vld [vmem:[%s1 + $0x80] sm:$0xff]
  %v29 = vld [vmem:[%s1 + $0x88] sm:$0xff]
  %v30 = vld [vmem:[%s1 + $0x90] sm:$0xff]
  %v31 = vld [vmem:[%s1 + $0x98] sm:$0xff]
  %v32 = vld [vmem:[%s1 + $0xa0] sm:$0xff]
  %v33 = vld [vmem:[%s1 + $0xa8] sm:$0xff]
  %v34 = vld [vmem:[%s1 + $0xb0] sm:$0xff]
  %v35 = vld [vmem:[%s1 + $0xb8] sm:$0xff]
  %v36 = vld [vmem:[%s1 + $0xc0] sm:$0xff]
  %v37 = vld [vmem:[%s1 + $0xc8] sm:$0xff]
  %v38 = vld [vmem:[%s1 + $0xd0] sm:$0xff]
  %v39 = vld [vmem:[%s1 + $0xd8] sm:$0xff]
  %v40 = vld [vmem:[%s1 + $0xe0] sm:$0xff]
  %v41 = vld [vmem:[%s1 + $0xe8] sm:$0xff]
  %v42 = vld [vmem:[%s1 + $0xf0] sm:$0xff]
  %v43 = vld [vmem:[%s1 + $0xf8] sm:$0xff]
  %v44 = vld [vmem:[%s1 + $0x100] sm:$0xff]
  %v45 = vld [vmem:[%s1 + $0x108] sm:$0xff]
  %v46 = vld [vmem:[%s1 + $0x110] sm:$0xff]
  %v47 = vld [vmem:[%s1 + $0x118] sm:$0xff]
  %v48 = vld [vmem:[%s1 + $0x120] sm:$0xff]
  %v49 = vld [vmem:[%s1 + $0x128] sm:$0xff]
  %v50 = vld [vmem:[%s1 + $0x130] sm:$0xff]
  %v51 = vld [vmem:[%s1 + $0x138] sm:$0xff]
  %v52 = vld [vmem:[%s1 + $0x140] sm:$0xff]
  %v53 = vld [vmem:[%s1 + $0x148] sm:$0xff]
  %v54 = vld [vmem:[%s1 + $0x150] sm:$0xff]
  %v55 = vld [vmem:[%s1 + $0x158] sm:$0xff]
  %v56 = vld [vmem:[%s1 + $0x160] sm:$0xff]
  %v57 = vld [vmem:[%s1 + $0x168] sm:$0xff]
  %v58 = vld [vmem:[%s1 + $0x170] sm:$0xff]
  %v59 = vld [vmem:[%s1 + $0x178] sm:$0xff]
  %vm60 = vcmask 261120
  %v62 = vsel %vm60, %v11, 0
  %v65 = vsel %vm60, %v12, 0
  %v68 = vsel %vm60, %v13, 0
  %v71 = vsel %vm60, %v14, 0
  %v74 = vsel %vm60, %v15, 0
  %v77 = vsel %vm60, %v16, 0
  %v80 = vsel %vm60, %v17, 0
  %v83 = vsel %vm60, %v18, 0
  %v86 = vsel %vm60, %v19, 0
  %v89 = vsel %vm60, %v20, 0
  %v92 = vsel %vm60, %v21, 0
  %v95 = vsel %vm60, %v22, 0
  %v98 = vsel %vm60, %v23, 0
  %v101 = vsel %vm60, %v24, 0
  %v104 = vsel %vm60, %v25, 0
  %v107 = vsel %vm60, %v26, 0
  %v110 = vsel %vm60, %v27, 0
  %v113 = vsel %vm60, %v28, 0
  %v116 = vsel %vm60, %v29, 0
  %v119 = vsel %vm60, %v30, 0
  %v122 = vsel %vm60, %v31, 0
  %v125 = vsel %vm60, %v32, 0
  %v128 = vsel %vm60, %v33, 0
  %v131 = vsel %vm60, %v34, 0
  %v134 = vsel %vm60, %v35, 0
  %v137 = vsel %vm60, %v36, 0
  %v140 = vsel %vm60, %v37, 0
  %v143 = vsel %vm60, %v38, 0
  %v146 = vsel %vm60, %v39, 0
  %v149 = vsel %vm60, %v40, 0
  %v152 = vsel %vm60, %v41, 0
  %v155 = vsel %vm60, %v42, 0
  %v158 = vsel %vm60, %v43, 0
  %v161 = vsel %vm60, %v44, 0
  %v164 = vsel %vm60, %v45, 0
  %v167 = vsel %vm60, %v46, 0
  %v170 = vsel %vm60, %v47, 0
  %v173 = vsel %vm60, %v48, 0
  %v176 = vsel %vm60, %v49, 0
  %v179 = vsel %vm60, %v50, 0
  %v182 = vsel %vm60, %v51, 0
  %v185 = vsel %vm60, %v52, 0
  %v188 = vsel %vm60, %v53, 0
  %v191 = vsel %vm60, %v54, 0
  %v194 = vsel %vm60, %v55, 0
  %v197 = vsel %vm60, %v56, 0
  %v200 = vsel %vm60, %v57, 0
  %v203 = vsel %vm60, %v58, 0
  %v206 = vsel %vm60, %v59, 0
  %208 = vmatpush.xpose.msra.mxu0 %v110
  %209 = vmatpush.xpose.msra.mxu0 %v107
  %210 = vmatpush.xpose.msra.mxu0 %v104
  %211 = vmatpush.xpose.msra.mxu0 %v101
  %212 = vmatpush.xpose.msra.mxu0 %v98
  %213 = vmatpush.xpose.msra.mxu0 %v95
  %214 = vmatpush.xpose.msra.mxu0 %v92
  %215 = vmatpush.xpose.msra.mxu0 %v89
  %216 = vmatpush.xpose.msra.mxu0 %v86
  %217 = vmatpush.xpose.msra.mxu0 %v83
  %218 = vmatpush.xpose.msra.mxu0 %v80
  %219 = vmatpush.xpose.msra.mxu0 %v77
  %220 = vmatpush.xpose.msra.mxu0 %v74
  %221 = vmatpush.xpose.msra.mxu0 %v71
  %222 = vmatpush.xpose.msra.mxu0 %v68
  %223 = vmatpush.xpose.msra.mxu0 %v65
  %224 = vmatmul.f32.gmra.mxu0 %v62
  %v225 = vpop.f32.mrf.mxu0
  %v226 = vadd.f32 0.0, %v225
  %227 = vdwg.mxu0
  %228 = vmatpush.xpose.msra.mxu0 %v158
  %229 = vmatpush.xpose.msra.mxu0 %v155
  %230 = vmatpush.xpose.msra.mxu0 %v152
  %231 = vmatpush.xpose.msra.mxu0 %v149
  %232 = vmatpush.xpose.msra.mxu0 %v146
  %233 = vmatpush.xpose.msra.mxu0 %v143
  %234 = vmatpush.xpose.msra.mxu0 %v140
  %235 = vmatpush.xpose.msra.mxu0 %v137
  %236 = vmatpush.xpose.msra.mxu0 %v134
  %237 = vmatpush.xpose.msra.mxu0 %v131
  %238 = vmatpush.xpose.msra.mxu0 %v128
  %239 = vmatpush.xpose.msra.mxu0 %v125
  %240 = vmatpush.xpose.msra.mxu0 %v122
  %241 = vmatpush.xpose.msra.mxu0 %v119
  %242 = vmatpush.xpose.msra.mxu0 %v116
  %243 = vmatpush.xpose.msra.mxu0 %v113
  %244 = vmatmul.f32.gmra.mxu0 %v62
  %v245 = vpop.f32.mrf.mxu0
  %v246 = vadd.f32 0.0, %v245
  %247 = vdwg.mxu0
  %248 = vmatpush.xpose.msra.mxu0 %v206
  %249 = vmatpush.xpose.msra.mxu0 %v203
  %250 = vmatpush.xpose.msra.mxu0 %v200
  %251 = vmatpush.xpose.msra.mxu0 %v197
  %252 = vmatpush.xpose.msra.mxu0 %v194
  %253 = vmatpush.xpose.msra.mxu0 %v191
  %254 = vmatpush.xpose.msra.mxu0 %v188
  %255 = vmatpush.xpose.msra.mxu0 %v185
  %256 = vmatpush.xpose.msra.mxu0 %v182
  %257 = vmatpush.xpose.msra.mxu0 %v179
  %258 = vmatpush.xpose.msra.mxu0 %v176
  %259 = vmatpush.xpose.msra.mxu0 %v173
  %260 = vmatpush.xpose.msra.mxu0 %v170
  %261 = vmatpush.xpose.msra.mxu0 %v167
  %262 = vmatpush.xpose.msra.mxu0 %v164
  %263 = vmatpush.xpose.msra.mxu0 %v161
  %264 = vmatmul.f32.gmra.mxu0 %v62
  %v265 = vpop.f32.mrf.mxu0
  %v266 = vadd.f32 0.0, %v265
  %267 = vdwg.mxu0
  %268 = vst [vmem:[%s2] sm:$0xff] %v226
  %269 = vst [vmem:[%s2 + $0x8] sm:$0xff] %v246
  %270 = vst [vmem:[%s2 + $0x10] sm:$0xff] %v266
  // Predicated region
  $region10: #{mbgrl_forward.1} parent=0 // pred_check
    _
  $region11: #{mbgrl_forward.1} parent=0 // pred_check_branch
    %272 = sbr.rel (0) target = $region13
  $region12: #{mbgrl_forward.1} parent=0 // pred_region
    _
  $region13: #{mbgrl_forward.1} parent=0 // pred_fallthru
    _
  // Predicated region
  $region14: #{mbgrl_forward.1} parent=0 // pred_check
    _
  $region15: #{mbgrl_forward.1} parent=0 // pred_check_branch
    %274 = sbr.rel (0) target = $region17
  $region16: #{mbgrl_forward.1} parent=0 // pred_region
    _
  $region17: #{mbgrl_forward.1} parent=0 // pred_fallthru
    _

</llo_original>
